<compile_context>
chip_gen: v7x
topology: tpu7x:2x2x1
jax: 0.10.0
libtpu: 0.0.40
codegen_flags: <defaults>
</compile_context>

<pallas_src>
import functools

import jax
import jax.numpy as jnp
import numpy as np
from jax.experimental import pallas as pl
from jax.experimental.pallas import tpu as pltpu


# --------------------------------------------------------------------------- #
# Kernel bodies
# --------------------------------------------------------------------------- #
def _channel_mix(x_in, w_ref, b_ref, use_mxu):
    """h = W @ x_in + b over a (C, T) tile.

    use_mxu=False: unrolled VPU broadcast-FMA mix, w/b live in SMEM (right for
                   tiny C, e.g. 4 latent channels, where a matmul would waste
                   almost the whole MXU and pay result-FIFO drain latency).
    use_mxu=True : MXU dot, w/b live in VMEM (right for large C).
    """
    if use_mxu:
        return (jnp.dot(w_ref[...].astype(jnp.float32), x_in,
                        preferred_element_type=jnp.float32)
                + b_ref[...].astype(jnp.float32))
    c_dim = x_in.shape[0]
    rows = []
    for c in range(c_dim):              # static unroll, C*C scalar*vector FMAs
        acc = x_in[0:1, :] * w_ref[c, 0]
        for k in range(1, c_dim):
            acc = acc + x_in[k:k + 1, :] * w_ref[c, k]
        rows.append(acc + b_ref[0, c])
    return jnp.concatenate(rows, axis=0)  # (C, T)


def _inpaint_kernel(sigma_ref, x_ref, mask_ref, latent_ref, noise_ref,
                    w_ref, b_ref, out_ref, *, use_mxu):
    # sigma_ref: (N,) f32 in SMEM (scalar prefetch); index by batch grid axis.
    sigma = sigma_ref[pl.program_id(0)]

    x = x_ref[0].astype(jnp.float32)       # (C,  T)
    m = mask_ref[0].astype(jnp.float32)    # (Cm, T), Cm in {1, C}; broadcasts
    lat = latent_ref[0].astype(jnp.float32)
    nz = noise_ref[0].astype(jnp.float32)

    lm = 1.0 - m
    # x = x * denoise_mask + (latent_image + noise * sigma) * latent_mask
    x_in = x * m + (lat + nz * sigma) * lm

    # synthetic inner model: 1x1 conv over channels + Karras-style 1/(sigma^2+1)
    h = _channel_mix(x_in, w_ref, b_ref, use_mxu)
    out = h * (1.0 / (sigma * sigma + 1.0))

    # out *= denoise_mask ; out += latent_image * latent_mask
    out = out * m + lat * lm
    out_ref[0] = out.astype(out_ref.dtype)


def _no_mask_kernel(sigma_ref, x_ref, w_ref, b_ref, out_ref, *, use_mxu):
    # denoise_mask is None: no blend, only x streams through HBM.
    sigma = sigma_ref[pl.program_id(0)]
    x = x_ref[0].astype(jnp.float32)
    h = _channel_mix(x, w_ref, b_ref, use_mxu)
    out_ref[0] = (h * (1.0 / (sigma * sigma + 1.0))).astype(out_ref.dtype)


# --------------------------------------------------------------------------- #
# Wrapper
# --------------------------------------------------------------------------- #
def _choose_hw_tile(hw, n_f32_rows):
    """Largest HW tile that (a) is a multiple of 128 dividing HW and (b) keeps
    the double-buffered per-step working set around <= 8 MiB, so the same tile
    fits v7x's 64 MiB VMEM as comfortably as v5e/v6e's 128 MiB."""
    if hw % 128 != 0:
        return hw                               # full extent is always legal
    cap = (8 << 20) // max(1, 2 * 4 * n_f32_rows)
    cap = max(128, min(8192, (cap // 128) * 128))
    t = (min(cap, hw) // 128) * 128
    while hw % t:
        t -= 128
    return t


def _vmem_limit_bytes(n_rows, t):
    per_step = n_rows * t * 4                   # f32-equivalent worst case
    return int(min(100 << 20, max(8 << 20, 2 * per_step + (2 << 20))))


def ksampler_x0_inpaint(x, sigma, denoise_mask, latent_image, noise, w, b):
    """x, latent_image, noise: (N, C, H, W); denoise_mask: None, (N,1,H,W) or
    (N,C,H,W); sigma: (N,); w: (C,C); b: (C,)."""
    N, C, H, W = x.shape
    HW = H * W
    out_dtype = x.dtype
    # Tiny channel counts -> unrolled VPU mix; big channel counts -> MXU dot.
    use_mxu = C > 8

    sigma32 = sigma.reshape(N).astype(jnp.float32)
    w32 = w.astype(jnp.float32)
    if use_mxu:
        b_arr = b.reshape(C, 1).astype(jnp.float32)
        w_spec = pl.BlockSpec((C, C), lambda i, j, *_: (0, 0))
        b_spec = pl.BlockSpec((C, 1), lambda i, j, *_: (0, 0))
    else:
        b_arr = b.reshape(1, C).astype(jnp.float32)
        w_spec = pl.BlockSpec((C, C), lambda i, j, *_: (0, 0),
                              memory_space=pltpu.MemorySpace.SMEM)
        b_spec = pl.BlockSpec((1, C), lambda i, j, *_: (0, 0),
                              memory_space=pltpu.MemorySpace.SMEM)

    x2 = x.reshape(N, C, HW)                    # keep native dtype in HBM

    # ---------------- denoise_mask is None: fast path, stream only x -------- #
    if denoise_mask is None:
        T = _choose_hw_tile(HW, 2 * C)
        img_spec = pl.BlockSpec((1, C, T), lambda i, j, *_: (i, 0, j))
        out = pl.pallas_call(
            functools.partial(_no_mask_kernel, use_mxu=use_mxu),
            out_shape=jax.ShapeDtypeStruct((N, C, HW), out_dtype),
            grid_spec=pltpu.PrefetchScalarGridSpec(
                num_scalar_prefetch=1,
                grid=(N, HW // T),
                in_specs=[img_spec, w_spec, b_spec],
                out_specs=img_spec),
            compiler_params=pltpu.CompilerParams(
                dimension_semantics=("parallel", "parallel"),
                vmem_limit_bytes=_vmem_limit_bytes(2 * C, T)),
        )(sigma32, x2, w32, b_arr)
        return out.reshape(N, C, H, W)

    # ---------------- masked path ------------------------------------------ #
    Cm = denoise_mask.shape[1]
    assert Cm in (1, C), "denoise_mask must be (N,1,H,W) or (N,C,H,W)"
    m2 = denoise_mask.reshape(N, Cm, HW)
    l2 = latent_image.reshape(N, C, HW)
    n2 = noise.reshape(N, C, HW)

    n_rows = 4 * C + Cm                         # x, latent, noise, out (C each) + mask
    T = _choose_hw_tile(HW, n_rows)
    img_spec = pl.BlockSpec((1, C, T), lambda i, j, *_: (i, 0, j))
    mask_spec = pl.BlockSpec((1, Cm, T), lambda i, j, *_: (i, 0, j))

    out = pl.pallas_call(
        functools.partial(_inpaint_kernel, use_mxu=use_mxu),
        out_shape=jax.ShapeDtypeStruct((N, C, HW), out_dtype),
        grid_spec=pltpu.PrefetchScalarGridSpec(
            num_scalar_prefetch=1,
            grid=(N, HW // T),
            in_specs=[img_spec, mask_spec, img_spec, img_spec, w_spec, b_spec],
            out_specs=img_spec),
        compiler_params=pltpu.CompilerParams(
            dimension_semantics=("parallel", "parallel"),
            vmem_limit_bytes=_vmem_limit_bytes(n_rows, T)),
    )(sigma32, x2, m2, l2, n2, w32, b_arr)
    return out.reshape(N, C, H, W)


# --------------------------------------------------------------------------- #
# Pure-JAX reference mirroring the PyTorch forward semantics
# --------------------------------------------------------------------------- #
def _reference(x, sigma, denoise_mask, latent_image, noise, w, b):
    sig_b = sigma.reshape((sigma.shape[0],) + (1,) * (x.ndim - 1)).astype(jnp.float32)
    xf = x.astype(jnp.float32)
    if denoise_mask is not None:
        m = denoise_mask.astype(jnp.float32)
        lm = 1.0 - m
        xf = xf * m + (latent_image.astype(jnp.float32)
                       + noise.astype(jnp.float32) * sig_b) * lm
    # synthetic inner model (same as kernel): 1x1 conv + 1/(sigma^2+1)
    h = (jnp.einsum('oc,nchw->nohw', w.astype(jnp.float32), xf)
         + b.reshape(1, -1, 1, 1).astype(jnp.float32))
    out = h / (sig_b * sig_b + 1.0)
    if denoise_mask is not None:
        out = out * m + latent_image.astype(jnp.float32) * lm
    return out.astype(x.dtype)


if __name__ == "__main__":
    key = jax.random.PRNGKey(0)
    kx, km, kmf, kl, kn, ks, kw, kb = jax.random.split(key, 8)

    N, C, H, W = 2, 4, 16, 16
    x = jax.random.normal(kx, (N, C, H, W), jnp.float32)
    latent_image = jax.random.normal(kl, (N, C, H, W), jnp.float32)
    noise = jax.random.normal(kn, (N, C, H, W), jnp.float32)
    sigma = jnp.abs(jax.random.normal(ks, (N,), jnp.float32)) + 0.5

    # deterministic synthetic inner-model parameters (1x1 conv over channels)
    # TODO(synk): the real inner_model is an arbitrary UNet denoiser; only the
    # mask blend around it plus this synthetic denoiser are fused here.
    w = 0.1 * jax.random.normal(kw, (C, C), jnp.float32) + jnp.eye(C, dtype=jnp.float32)
    b = 0.05 * jax.random.normal(kb, (C,), jnp.float32)

    # 1) usual inpaint case: per-pixel mask (N, 1, H, W)
    mask_px = jax.nn.sigmoid(jax.random.normal(km, (N, 1, H, W), jnp.float32))
    out1 = jax.block_until_ready(
        ksampler_x0_inpaint(x, sigma, mask_px, latent_image, noise, w, b))
    ref1 = _reference(x, sigma, mask_px, latent_image, noise, w, b)
    np.testing.assert_allclose(np.asarray(out1), np.asarray(ref1),
                               rtol=1e-5, atol=1e-5)

    # 2) per-channel mask (N, C, H, W)
    mask_full = jax.nn.sigmoid(jax.random.normal(kmf, (N, C, H, W), jnp.float32))
    out2 = jax.block_until_ready(
        ksampler_x0_inpaint(x, sigma, mask_full, latent_image, noise, w, b))
    ref2 = _reference(x, sigma, mask_full, latent_image, noise, w, b)
    np.testing.assert_allclose(np.asarray(out2), np.asarray(ref2),
                               rtol=1e-5, atol=1e-5)

    # 3) denoise_mask is None: fast path, no blend
    out3 = jax.block_until_ready(
        ksampler_x0_inpaint(x, sigma, None, latent_image, noise, w, b))
    ref3 = _reference(x, sigma, None, latent_image, noise, w, b)
    np.testing.assert_allclose(np.asarray(out3), np.asarray(ref3),
                               rtol=1e-5, atol=1e-5)

    print("KERNEL_OK")
</pallas_src>

<mosaic_0001>
module attributes {stable_mosaic.version = 11 : i64} {
  func.func @_inpaint_kernel(%arg0: i32, %arg1: i32, %arg2: memref<2xf32, #tpu.memory_space<smem>>, %arg3: memref<1x4x256xf32, #tpu.memory_space<vmem>>, %arg4: memref<1x1x256xf32, #tpu.memory_space<vmem>>, %arg5: memref<1x4x256xf32, #tpu.memory_space<vmem>>, %arg6: memref<1x4x256xf32, #tpu.memory_space<vmem>>, %arg7: memref<4x4xf32, #tpu.memory_space<smem>>, %arg8: memref<1x4xf32, #tpu.memory_space<smem>>, %arg9: memref<1x4x256xf32, #tpu.memory_space<vmem>>) attributes {dimension_semantics = [#tpu.dimension_semantics<parallel>, #tpu.dimension_semantics<parallel>], iteration_bounds = array<i64: 2, 1>, scalar_prefetch = 1 : i64, scratch_operands = 0 : i64, tpu.core_type = #tpu.core_type<tc>, window_params = [{transform_indices = @transform_0, window_bounds = array<i64: 1, 4, 256>}, {transform_indices = @transform_1, window_bounds = array<i64: 1, 1, 256>}, {transform_indices = @transform_2, window_bounds = array<i64: 1, 4, 256>}, {transform_indices = @transform_3, window_bounds = array<i64: 1, 4, 256>}, {transform_indices = @transform_4, window_bounds = array<i64: 4, 4>}, {transform_indices = @transform_5, window_bounds = array<i64: 1, 4>}, {transform_indices = @transform_6, window_bounds = array<i64: 1, 4, 256>}]} {
    %0 = arith.index_cast %arg0 : i32 to index
    %1 = memref.load %arg2[%0] : memref<2xf32, #tpu.memory_space<smem>>
    %c0 = arith.constant 0 : index
    %c0_0 = arith.constant 0 : index
    %c0_1 = arith.constant 0 : index
    %2 = vector.load %arg3[%c0, %c0_0, %c0_1] : memref<1x4x256xf32, #tpu.memory_space<vmem>>, vector<1x4x256xf32>
    %3 = vector.shape_cast %2 : vector<1x4x256xf32> to vector<4x256xf32>
    %c0_2 = arith.constant 0 : index
    %c0_3 = arith.constant 0 : index
    %c0_4 = arith.constant 0 : index
    %4 = vector.load %arg4[%c0_2, %c0_3, %c0_4] : memref<1x1x256xf32, #tpu.memory_space<vmem>>, vector<1x1x256xf32>
    %5 = vector.shape_cast %4 : vector<1x1x256xf32> to vector<1x256xf32>
    %c0_5 = arith.constant 0 : index
    %c0_6 = arith.constant 0 : index
    %c0_7 = arith.constant 0 : index
    %6 = vector.load %arg5[%c0_5, %c0_6, %c0_7] : memref<1x4x256xf32, #tpu.memory_space<vmem>>, vector<1x4x256xf32>
    %7 = vector.shape_cast %6 : vector<1x4x256xf32> to vector<4x256xf32>
    %c0_8 = arith.constant 0 : index
    %c0_9 = arith.constant 0 : index
    %c0_10 = arith.constant 0 : index
    %8 = vector.load %arg6[%c0_8, %c0_9, %c0_10] : memref<1x4x256xf32, #tpu.memory_space<vmem>>, vector<1x4x256xf32>
    %9 = vector.shape_cast %8 : vector<1x4x256xf32> to vector<4x256xf32>
    %cst = arith.constant 1.000000e+00 : f32
    %10 = vector.broadcast %cst : f32 to vector<1x256xf32>
    %11 = arith.subf %10, %5 : vector<1x256xf32>
    %12 = vector.broadcast %5 : vector<1x256xf32> to vector<4x256xf32>
    %13 = arith.mulf %3, %12 : vector<4x256xf32>
    %14 = vector.broadcast %1 : f32 to vector<4x256xf32>
    %15 = arith.mulf %9, %14 : vector<4x256xf32>
    %16 = arith.addf %7, %15 : vector<4x256xf32>
    %17 = vector.broadcast %11 : vector<1x256xf32> to vector<4x256xf32>
    %18 = arith.mulf %16, %17 : vector<4x256xf32>
    %19 = arith.addf %13, %18 : vector<4x256xf32>
    %20 = vector.extract_strided_slice %19 {offsets = [0, 0], sizes = [1, 256], strides = [1, 1]} : vector<4x256xf32> to vector<1x256xf32>
    %c0_11 = arith.constant 0 : index
    %c0_12 = arith.constant 0 : index
    %21 = memref.load %arg7[%c0_11, %c0_12] : memref<4x4xf32, #tpu.memory_space<smem>>
    %22 = vector.broadcast %21 : f32 to vector<1x256xf32>
    %23 = arith.mulf %20, %22 : vector<1x256xf32>
    %24 = vector.extract_strided_slice %19 {offsets = [1, 0], sizes = [1, 256], strides = [1, 1]} : vector<4x256xf32> to vector<1x256xf32>
    %c0_13 = arith.constant 0 : index
    %c1 = arith.constant 1 : index
    %25 = memref.load %arg7[%c0_13, %c1] : memref<4x4xf32, #tpu.memory_space<smem>>
    %26 = vector.broadcast %25 : f32 to vector<1x256xf32>
    %27 = arith.mulf %24, %26 : vector<1x256xf32>
    %28 = arith.addf %23, %27 : vector<1x256xf32>
    %29 = vector.extract_strided_slice %19 {offsets = [2, 0], sizes = [1, 256], strides = [1, 1]} : vector<4x256xf32> to vector<1x256xf32>
    %c0_14 = arith.constant 0 : index
    %c2 = arith.constant 2 : index
    %30 = memref.load %arg7[%c0_14, %c2] : memref<4x4xf32, #tpu.memory_space<smem>>
    %31 = vector.broadcast %30 : f32 to vector<1x256xf32>
    %32 = arith.mulf %29, %31 : vector<1x256xf32>
    %33 = arith.addf %28, %32 : vector<1x256xf32>
    %34 = vector.extract_strided_slice %19 {offsets = [3, 0], sizes = [1, 256], strides = [1, 1]} : vector<4x256xf32> to vector<1x256xf32>
    %c0_15 = arith.constant 0 : index
    %c3 = arith.constant 3 : index
    %35 = memref.load %arg7[%c0_15, %c3] : memref<4x4xf32, #tpu.memory_space<smem>>
    %36 = vector.broadcast %35 : f32 to vector<1x256xf32>
    %37 = arith.mulf %34, %36 : vector<1x256xf32>
    %38 = arith.addf %33, %37 : vector<1x256xf32>
    %c0_16 = arith.constant 0 : index
    %c0_17 = arith.constant 0 : index
    %39 = memref.load %arg8[%c0_16, %c0_17] : memref<1x4xf32, #tpu.memory_space<smem>>
    %40 = vector.broadcast %39 : f32 to vector<1x256xf32>
    %41 = arith.addf %38, %40 : vector<1x256xf32>
    %42 = vector.extract_strided_slice %19 {offsets = [0, 0], sizes = [1, 256], strides = [1, 1]} : vector<4x256xf32> to vector<1x256xf32>
    %c1_18 = arith.constant 1 : index
    %c0_19 = arith.constant 0 : index
    %43 = memref.load %arg7[%c1_18, %c0_19] : memref<4x4xf32, #tpu.memory_space<smem>>
    %44 = vector.broadcast %43 : f32 to vector<1x256xf32>
    %45 = arith.mulf %42, %44 : vector<1x256xf32>
    %46 = vector.extract_strided_slice %19 {offsets = [1, 0], sizes = [1, 256], strides = [1, 1]} : vector<4x256xf32> to vector<1x256xf32>
    %c1_20 = arith.constant 1 : index
    %c1_21 = arith.constant 1 : index
    %47 = memref.load %arg7[%c1_20, %c1_21] : memref<4x4xf32, #tpu.memory_space<smem>>
    %48 = vector.broadcast %47 : f32 to vector<1x256xf32>
    %49 = arith.mulf %46, %48 : vector<1x256xf32>
    %50 = arith.addf %45, %49 : vector<1x256xf32>
    %51 = vector.extract_strided_slice %19 {offsets = [2, 0], sizes = [1, 256], strides = [1, 1]} : vector<4x256xf32> to vector<1x256xf32>
    %c1_22 = arith.constant 1 : index
    %c2_23 = arith.constant 2 : index
    %52 = memref.load %arg7[%c1_22, %c2_23] : memref<4x4xf32, #tpu.memory_space<smem>>
    %53 = vector.broadcast %52 : f32 to vector<1x256xf32>
    %54 = arith.mulf %51, %53 : vector<1x256xf32>
    %55 = arith.addf %50, %54 : vector<1x256xf32>
    %56 = vector.extract_strided_slice %19 {offsets = [3, 0], sizes = [1, 256], strides = [1, 1]} : vector<4x256xf32> to vector<1x256xf32>
    %c1_24 = arith.constant 1 : index
    %c3_25 = arith.constant 3 : index
    %57 = memref.load %arg7[%c1_24, %c3_25] : memref<4x4xf32, #tpu.memory_space<smem>>
    %58 = vector.broadcast %57 : f32 to vector<1x256xf32>
    %59 = arith.mulf %56, %58 : vector<1x256xf32>
    %60 = arith.addf %55, %59 : vector<1x256xf32>
    %c0_26 = arith.constant 0 : index
    %c1_27 = arith.constant 1 : index
    %61 = memref.load %arg8[%c0_26, %c1_27] : memref<1x4xf32, #tpu.memory_space<smem>>
    %62 = vector.broadcast %61 : f32 to vector<1x256xf32>
    %63 = arith.addf %60, %62 : vector<1x256xf32>
    %64 = vector.extract_strided_slice %19 {offsets = [0, 0], sizes = [1, 256], strides = [1, 1]} : vector<4x256xf32> to vector<1x256xf32>
    %c2_28 = arith.constant 2 : index
    %c0_29 = arith.constant 0 : index
    %65 = memref.load %arg7[%c2_28, %c0_29] : memref<4x4xf32, #tpu.memory_space<smem>>
    %66 = vector.broadcast %65 : f32 to vector<1x256xf32>
    %67 = arith.mulf %64, %66 : vector<1x256xf32>
    %68 = vector.extract_strided_slice %19 {offsets = [1, 0], sizes = [1, 256], strides = [1, 1]} : vector<4x256xf32> to vector<1x256xf32>
    %c2_30 = arith.constant 2 : index
    %c1_31 = arith.constant 1 : index
    %69 = memref.load %arg7[%c2_30, %c1_31] : memref<4x4xf32, #tpu.memory_space<smem>>
    %70 = vector.broadcast %69 : f32 to vector<1x256xf32>
    %71 = arith.mulf %68, %70 : vector<1x256xf32>
    %72 = arith.addf %67, %71 : vector<1x256xf32>
    %73 = vector.extract_strided_slice %19 {offsets = [2, 0], sizes = [1, 256], strides = [1, 1]} : vector<4x256xf32> to vector<1x256xf32>
    %c2_32 = arith.constant 2 : index
    %c2_33 = arith.constant 2 : index
    %74 = memref.load %arg7[%c2_32, %c2_33] : memref<4x4xf32, #tpu.memory_space<smem>>
    %75 = vector.broadcast %74 : f32 to vector<1x256xf32>
    %76 = arith.mulf %73, %75 : vector<1x256xf32>
    %77 = arith.addf %72, %76 : vector<1x256xf32>
    %78 = vector.extract_strided_slice %19 {offsets = [3, 0], sizes = [1, 256], strides = [1, 1]} : vector<4x256xf32> to vector<1x256xf32>
    %c2_34 = arith.constant 2 : index
    %c3_35 = arith.constant 3 : index
    %79 = memref.load %arg7[%c2_34, %c3_35] : memref<4x4xf32, #tpu.memory_space<smem>>
    %80 = vector.broadcast %79 : f32 to vector<1x256xf32>
    %81 = arith.mulf %78, %80 : vector<1x256xf32>
    %82 = arith.addf %77, %81 : vector<1x256xf32>
    %c0_36 = arith.constant 0 : index
    %c2_37 = arith.constant 2 : index
    %83 = memref.load %arg8[%c0_36, %c2_37] : memref<1x4xf32, #tpu.memory_space<smem>>
    %84 = vector.broadcast %83 : f32 to vector<1x256xf32>
    %85 = arith.addf %82, %84 : vector<1x256xf32>
    %86 = vector.extract_strided_slice %19 {offsets = [0, 0], sizes = [1, 256], strides = [1, 1]} : vector<4x256xf32> to vector<1x256xf32>
    %c3_38 = arith.constant 3 : index
    %c0_39 = arith.constant 0 : index
    %87 = memref.load %arg7[%c3_38, %c0_39] : memref<4x4xf32, #tpu.memory_space<smem>>
    %88 = vector.broadcast %87 : f32 to vector<1x256xf32>
    %89 = arith.mulf %86, %88 : vector<1x256xf32>
    %90 = vector.extract_strided_slice %19 {offsets = [1, 0], sizes = [1, 256], strides = [1, 1]} : vector<4x256xf32> to vector<1x256xf32>
    %c3_40 = arith.constant 3 : index
    %c1_41 = arith.constant 1 : index
    %91 = memref.load %arg7[%c3_40, %c1_41] : memref<4x4xf32, #tpu.memory_space<smem>>
    %92 = vector.broadcast %91 : f32 to vector<1x256xf32>
    %93 = arith.mulf %90, %92 : vector<1x256xf32>
    %94 = arith.addf %89, %93 : vector<1x256xf32>
    %95 = vector.extract_strided_slice %19 {offsets = [2, 0], sizes = [1, 256], strides = [1, 1]} : vector<4x256xf32> to vector<1x256xf32>
    %c3_42 = arith.constant 3 : index
    %c2_43 = arith.constant 2 : index
    %96 = memref.load %arg7[%c3_42, %c2_43] : memref<4x4xf32, #tpu.memory_space<smem>>
    %97 = vector.broadcast %96 : f32 to vector<1x256xf32>
    %98 = arith.mulf %95, %97 : vector<1x256xf32>
    %99 = arith.addf %94, %98 : vector<1x256xf32>
    %100 = vector.extract_strided_slice %19 {offsets = [3, 0], sizes = [1, 256], strides = [1, 1]} : vector<4x256xf32> to vector<1x256xf32>
    %c3_44 = arith.constant 3 : index
    %c3_45 = arith.constant 3 : index
    %101 = memref.load %arg7[%c3_44, %c3_45] : memref<4x4xf32, #tpu.memory_space<smem>>
    %102 = vector.broadcast %101 : f32 to vector<1x256xf32>
    %103 = arith.mulf %100, %102 : vector<1x256xf32>
    %104 = arith.addf %99, %103 : vector<1x256xf32>
    %c0_46 = arith.constant 0 : index
    %c3_47 = arith.constant 3 : index
    %105 = memref.load %arg8[%c0_46, %c3_47] : memref<1x4xf32, #tpu.memory_space<smem>>
    %106 = vector.broadcast %105 : f32 to vector<1x256xf32>
    %107 = arith.addf %104, %106 : vector<1x256xf32>
    %108 = tpu.concatenate %41, %63, %85, %107 in 0 : vector<1x256xf32>, vector<1x256xf32>, vector<1x256xf32>, vector<1x256xf32> -> vector<4x256xf32>
    %109 = arith.mulf %1, %1 : f32
    %cst_48 = arith.constant 1.000000e+00 : f32
    %110 = arith.addf %109, %cst_48 : f32
    %cst_49 = arith.constant 1.000000e+00 : f32
    %111 = arith.divf %cst_49, %110 : f32
    %112 = vector.broadcast %111 : f32 to vector<4x256xf32>
    %113 = arith.mulf %108, %112 : vector<4x256xf32>
    %114 = vector.broadcast %5 : vector<1x256xf32> to vector<4x256xf32>
    %115 = arith.mulf %113, %114 : vector<4x256xf32>
    %116 = vector.broadcast %11 : vector<1x256xf32> to vector<4x256xf32>
    %117 = arith.mulf %7, %116 : vector<4x256xf32>
    %118 = arith.addf %115, %117 : vector<4x256xf32>
    %c0_50 = arith.constant 0 : index
    %c0_51 = arith.constant 0 : index
    %c0_52 = arith.constant 0 : index
    %119 = vector.load %arg9[%c0_50, %c0_51, %c0_52] : memref<1x4x256xf32, #tpu.memory_space<vmem>>, vector<1x4x256xf32>
    %120 = vector.shape_cast %119 : vector<1x4x256xf32> to vector<4x256xf32>
    %121 = vector.shape_cast %118 : vector<4x256xf32> to vector<1x4x256xf32>
    tpu.vector_store %arg9[%c0_50, %c0_51, %c0_52], %121 {strides = array<i32>} : memref<1x4x256xf32, #tpu.memory_space<vmem>>, vector<1x4x256xf32>,
    return
  }
  func.func @transform_0(%arg0: i32, %arg1: i32, %arg2: memref<2xf32, #tpu.memory_space<smem>>) -> (i32, i32, i32) {
    %c0_i32 = arith.constant 0 : i32
    %c0_i32_0 = arith.constant 0 : i32
    return %arg0, %c0_i32, %arg1 : i32, i32, i32
  }
  func.func @transform_1(%arg0: i32, %arg1: i32, %arg2: memref<2xf32, #tpu.memory_space<smem>>) -> (i32, i32, i32) {
    %c0_i32 = arith.constant 0 : i32
    %c0_i32_0 = arith.constant 0 : i32
    return %arg0, %c0_i32, %arg1 : i32, i32, i32
  }
  func.func @transform_2(%arg0: i32, %arg1: i32, %arg2: memref<2xf32, #tpu.memory_space<smem>>) -> (i32, i32, i32) {
    %c0_i32 = arith.constant 0 : i32
    %c0_i32_0 = arith.constant 0 : i32
    return %arg0, %c0_i32, %arg1 : i32, i32, i32
  }
  func.func @transform_3(%arg0: i32, %arg1: i32, %arg2: memref<2xf32, #tpu.memory_space<smem>>) -> (i32, i32, i32) {
    %c0_i32 = arith.constant 0 : i32
    %c0_i32_0 = arith.constant 0 : i32
    return %arg0, %c0_i32, %arg1 : i32, i32, i32
  }
  func.func @transform_4(%arg0: i32, %arg1: i32, %arg2: memref<2xf32, #tpu.memory_space<smem>>) -> (i32, i32) {
    %c0_i32 = arith.constant 0 : i32
    %c0_i32_0 = arith.constant 0 : i32
    %c0_i32_1 = arith.constant 0 : i32
    return %c0_i32, %c0_i32_0 : i32, i32
  }
  func.func @transform_5(%arg0: i32, %arg1: i32, %arg2: memref<2xf32, #tpu.memory_space<smem>>) -> (i32, i32) {
    %c0_i32 = arith.constant 0 : i32
    %c0_i32_0 = arith.constant 0 : i32
    %c0_i32_1 = arith.constant 0 : i32
    return %c0_i32, %c0_i32_0 : i32, i32
  }
  func.func @transform_6(%arg0: i32, %arg1: i32, %arg2: memref<2xf32, #tpu.memory_space<smem>>) -> (i32, i32, i32) {
    %c0_i32 = arith.constant 0 : i32
    %c0_i32_0 = arith.constant 0 : i32
    return %arg0, %c0_i32, %arg1 : i32, i32, i32
  }
}

</mosaic_0001>

<llo_original>
// kernel: tpu_custom_call.1
$region0: #{tpu_custom_call.1}
  #allocation0 [shape = 'u32[]', space=smem, size = 0x4, offset = 0x4, fixed_abs, tag = 'smem constant byte address 0x4 - core index']
  #allocation1 [shape = 'u32[144,128]{1,0:T(1,128)}', space=vmem, size = 0x12000, scoped, tag = 'internal scratch']
  #allocation2 [shape = 's32[1]{0}', space=sflag, size = 0x4, scoped, tag = 'scoped memory for tpu_custom_call.1']
  #allocation3 [shape = 'u8[512]{0}', space=smem, size = 0x200, scoped, tag = 'prefetched SMEM operand 0']
  %s0 = inlined_call_operand.hbm [shape: f32[2], index: 0, kind: input, shape index: {}]
  %s1 = inlined_call_operand.hbm [shape: f32[2,4,256], index: 1, kind: input, shape index: {}]
  %s2 = inlined_call_operand.vmem [shape: f32[2,1,256], index: 2, kind: input, shape index: {}]
  %s3 = inlined_call_operand.hbm [shape: f32[2,4,256], index: 3, kind: input, shape index: {}]
  %s4 = inlined_call_operand.hbm [shape: f32[2,4,256], index: 4, kind: input, shape index: {}]
  %s5 = inlined_call_operand.vmem [shape: f32[4,4], index: 5, kind: input, shape index: {}]
  %s6 = inlined_call_operand.vmem [shape: f32[1,4], index: 6, kind: input, shape index: {}]
  %s7 = inlined_call_operand.hbm [shape: f32[2,4,256], index: 7, kind: output, shape index: {}]
  %s8 = sld [smem:[#allocation0]]
  $region77: #{tpu_custom_call.1} parent=0
    _
  %s10 = ssub.s32 1, %s8
  %s11 = scalar_select 0, %s10, %s8
  %13 = dma.hbm_to_smem %s0, 16, [#allocation3], [#allocation2]
  %14 = dma.done [#allocation2], 16
  %15 = sfence
  $region1: #{tpu_custom_call.1} parent=0
    #allocation4 [shape = 'u8[8192]{0}', space=vmem, size = 0x2000, scoped, tag = 'input window, operand 1']
    #allocation5 [shape = 's32[2]{0}', space=sflag, size = 0x8, scoped, tag = 'scoped memory for tpu_custom_call.1']
    #allocation6 [shape = 's32[2]{0}', space=sflag, size = 0x8, scoped, tag = 'scoped memory for tpu_custom_call.1']
    #allocation7 [shape = 's32[2]{0}', space=sflag, size = 0x8, scoped, tag = 'scoped memory for tpu_custom_call.1']
    #allocation8 [shape = 'u8[8192]{0}', space=vmem, size = 0x2000, scoped, tag = 'input window, operand 3']
    #allocation9 [shape = 's32[2]{0}', space=sflag, size = 0x8, scoped, tag = 'scoped memory for tpu_custom_call.1']
    #allocation10 [shape = 'u8[8192]{0}', space=vmem, size = 0x2000, scoped, tag = 'input window, operand 4']
    #allocation11 [shape = 'u8[2048]{0}', space=smem, size = 0x800, scoped, tag = 'input window, operand 5, single buffered']
    #allocation12 [shape = 'u8[512]{0}', space=smem, size = 0x200, scoped, tag = 'input window, operand 6, single buffered']
    #allocation13 [shape = 's32[1]{0}', space=sflag, size = 0x4, scoped, tag = 'scoped memory for tpu_custom_call.1']
    #allocation14 [shape = 'u8[8192]{0}', space=vmem, size = 0x2000, scoped, tag = 'output window, operand 0']
    %16 = vsyncpa [#allocation5], 0
    %s17 = scalar_lea.sflag [#allocation5], 1
    %18 = vsyncpa %s17, 0
    %19 = vsyncpa [#allocation9], 0
    %s20 = scalar_lea.sflag [#allocation9], 1
    %21 = vsyncpa %s20, 0
    %22 = vsyncpa [#allocation7], 0
    %23 = vsyncpa [#allocation13], 0
    %24 = vsyncpa [#allocation6], 0
    %s25 = scalar_lea.sflag [#allocation6], 1
    %26 = vsyncpa %s25, 0
    loop: start=0, step=1, limit=4
    $region2: #{tpu_custom_call.1} parent=1 // loop_pre_header
      _
    $region3: #{tpu_custom_call.1} parent=1 // loop_header
      %s28 = sphi 0, %s32
      %p29 = scmp.ge.s32.totalorder %s28, 4
      %s35 = sphi 0, %s47
      %s36 = sphi 0, %s43
      %s37 = sphi 0, %s35
      %s38 = sphi 0, %s36
      %s39 = sphi 0, %s37
      %s40 = sphi 0, %s38
      %s52 = sphi 0, %s54
      %s55 = sphi 0, %s52
      %s56 = sphi 0, %s55
      %s72 = sphi 0, %s56
      %s80 = sphi 0, %s82
      %s83 = sphi 0, %s80
      %s84 = sphi 0, %s83
      %s100 = sphi 0, %s84
      %s108 = sphi 0, %s110
      %s111 = sphi 0, %s108
      %s112 = sphi 0, %s111
      %s128 = sphi 0, %s112
      %s136 = sphi 0, %s138
      %s139 = sphi 0, %s136
      %s140 = sphi 0, %s139
      %s156 = sphi 0, %s140
      %s160 = sphi 0, %s160
      %s162 = sphi 0, %s160
      %s163 = sphi 0, %s162
      %s177 = sphi 0, %s163
      %s181 = sphi 0, %s181
      %s183 = sphi 0, %s181
      %s184 = sphi 0, %s183
      %s198 = sphi 0, %s184
      %s206 = sphi 0, %s208
      %s209 = sphi 0, %s206
      %s210 = sphi 0, %s209
      %s226 = sphi 0, %s210
    $region4: #{tpu_custom_call.1} parent=1 // loop_header_branch
      %31 = sbr.rel (%p29) target = $region8
    $region5: #{tpu_custom_call.1} parent=1 // loop_body
      %s33 = ssub.s32 %s28, 1
      %s34 = ssub.s32 %s28, 2
      %s41 = sadd.s32 1, %s36
      %p42 = scmp.ge.s32.totalorder %s41, 1
      %s43 = scalar_select %p42, 0, %s41
      %s44 = sadd.s32 1, %s35
      %s45 = scalar_select %p42, %s44, %s35
      %p46 = scmp.ge.s32.totalorder %s45, 2
      %s47 = scalar_select %p46, 0, %s45
      %s48 = ssub.s32 %s35, %s47
      %s49 = ssub.s32 %s36, %s43
      %s50 = sor.u32 %s48, %s49
      %p51 = scmp.eq.s32.totalorder %s50, 0
      %s53 = sadd.s32 %s52, 1
      %s54 = scalar_select %p51, %s52, %s53
      %p57 = pneg %p51
      %p58 = scmp.eq.s32.totalorder %s28, 1
      %p59 = por %p57, %p58
      %p60 = scmp.ne.s32.totalorder %s52, %s55
      %p61 = scmp.eq.s32.totalorder %s28, 0
      %p62 = por %p60, %p61
      %p63 = scmp.ne.s32.totalorder %s52, %s55
      %p64 = scmp.eq.s32.totalorder %s33, 1
      %p65 = por %p63, %p64
      %p66 = scmp.ne.s32.totalorder %s55, %s56
      %p67 = scmp.eq.s32.totalorder %s33, 0
      %p68 = por %p66, %p67
      %p69 = scmp.ne.s32.totalorder %s55, %s56
      %p70 = scmp.eq.s32.totalorder %s34, 1
      %p71 = por %p69, %p70
      %p73 = scmp.ne.s32.totalorder %s56, %s72
      %p74 = scmp.eq.s32.totalorder %s34, 0
      %p75 = por %p73, %p74
      %s76 = ssub.s32 %s35, %s47
      %s77 = ssub.s32 %s36, %s43
      %s78 = sor.u32 %s76, %s77
      %p79 = scmp.eq.s32.totalorder %s78, 0
      %s81 = sadd.s32 %s80, 1
      %s82 = scalar_select %p79, %s80, %s81
      %p85 = pneg %p79
      %p86 = scmp.eq.s32.totalorder %s28, 1
      %p87 = por %p85, %p86
      %p88 = scmp.ne.s32.totalorder %s80, %s83
      %p89 = scmp.eq.s32.totalorder %s28, 0
      %p90 = por %p88, %p89
      %p91 = scmp.ne.s32.totalorder %s80, %s83
      %p92 = scmp.eq.s32.totalorder %s33, 1
      %p93 = por %p91, %p92
      %p94 = scmp.ne.s32.totalorder %s83, %s84
      %p95 = scmp.eq.s32.totalorder %s33, 0
      %p96 = por %p94, %p95
      %p97 = scmp.ne.s32.totalorder %s83, %s84
      %p98 = scmp.eq.s32.totalorder %s34, 1
      %p99 = por %p97, %p98
      %p101 = scmp.ne.s32.totalorder %s84, %s100
      %p102 = scmp.eq.s32.totalorder %s34, 0
      %p103 = por %p101, %p102
      %s104 = ssub.s32 %s35, %s47
      %s105 = ssub.s32 %s36, %s43
      %s106 = sor.u32 %s104, %s105
      %p107 = scmp.eq.s32.totalorder %s106, 0
      %s109 = sadd.s32 %s108, 1
      %s110 = scalar_select %p107, %s108, %s109
      %p113 = pneg %p107
      %p114 = scmp.eq.s32.totalorder %s28, 1
      %p115 = por %p113, %p114
      %p116 = scmp.ne.s32.totalorder %s108, %s111
      %p117 = scmp.eq.s32.totalorder %s28, 0
      %p118 = por %p116, %p117
      %p119 = scmp.ne.s32.totalorder %s108, %s111
      %p120 = scmp.eq.s32.totalorder %s33, 1
      %p121 = por %p119, %p120
      %p122 = scmp.ne.s32.totalorder %s111, %s112
      %p123 = scmp.eq.s32.totalorder %s33, 0
      %p124 = por %p122, %p123
      %p125 = scmp.ne.s32.totalorder %s111, %s112
      %p126 = scmp.eq.s32.totalorder %s34, 1
      %p127 = por %p125, %p126
      %p129 = scmp.ne.s32.totalorder %s112, %s128
      %p130 = scmp.eq.s32.totalorder %s34, 0
      %p131 = por %p129, %p130
      %s132 = ssub.s32 %s35, %s47
      %s133 = ssub.s32 %s36, %s43
      %s134 = sor.u32 %s132, %s133
      %p135 = scmp.eq.s32.totalorder %s134, 0
      %s137 = sadd.s32 %s136, 1
      %s138 = scalar_select %p135, %s136, %s137
      %p141 = pneg %p135
      %p142 = scmp.eq.s32.totalorder %s28, 1
      %p143 = por %p141, %p142
      %p144 = scmp.ne.s32.totalorder %s136, %s139
      %p145 = scmp.eq.s32.totalorder %s28, 0
      %p146 = por %p144, %p145
      %p147 = scmp.ne.s32.totalorder %s136, %s139
      %p148 = scmp.eq.s32.totalorder %s33, 1
      %p149 = por %p147, %p148
      %p150 = scmp.ne.s32.totalorder %s139, %s140
      %p151 = scmp.eq.s32.totalorder %s33, 0
      %p152 = por %p150, %p151
      %p153 = scmp.ne.s32.totalorder %s139, %s140
      %p154 = scmp.eq.s32.totalorder %s34, 1
      %p155 = por %p153, %p154
      %p157 = scmp.ne.s32.totalorder %s140, %s156
      %p158 = scmp.eq.s32.totalorder %s34, 0
      %p159 = por %p157, %p158
      %s161 = sadd.s32 %s160, 1
      %p164 = scmp.eq.s32.totalorder %s28, 1
      %p165 = scmp.ne.s32.totalorder %s160, %s162
      %p166 = scmp.eq.s32.totalorder %s28, 0
      %p167 = por %p165, %p166
      %p168 = scmp.ne.s32.totalorder %s160, %s162
      %p169 = scmp.eq.s32.totalorder %s33, 1
      %p170 = por %p168, %p169
      %p171 = scmp.ne.s32.totalorder %s162, %s163
      %p172 = scmp.eq.s32.totalorder %s33, 0
      %p173 = por %p171, %p172
      %p174 = scmp.ne.s32.totalorder %s162, %s163
      %p175 = scmp.eq.s32.totalorder %s34, 1
      %p176 = por %p174, %p175
      %p178 = scmp.ne.s32.totalorder %s163, %s177
      %p179 = scmp.eq.s32.totalorder %s34, 0
      %p180 = por %p178, %p179
      %s182 = sadd.s32 %s181, 1
      %p185 = scmp.eq.s32.totalorder %s28, 1
      %p186 = scmp.ne.s32.totalorder %s181, %s183
      %p187 = scmp.eq.s32.totalorder %s28, 0
      %p188 = por %p186, %p187
      %p189 = scmp.ne.s32.totalorder %s181, %s183
      %p190 = scmp.eq.s32.totalorder %s33, 1
      %p191 = por %p189, %p190
      %p192 = scmp.ne.s32.totalorder %s183, %s184
      %p193 = scmp.eq.s32.totalorder %s33, 0
      %p194 = por %p192, %p193
      %p195 = scmp.ne.s32.totalorder %s183, %s184
      %p196 = scmp.eq.s32.totalorder %s34, 1
      %p197 = por %p195, %p196
      %p199 = scmp.ne.s32.totalorder %s184, %s198
      %p200 = scmp.eq.s32.totalorder %s34, 0
      %p201 = por %p199, %p200
      %s202 = ssub.s32 %s35, %s47
      %s203 = ssub.s32 %s36, %s43
      %s204 = sor.u32 %s202, %s203
      %p205 = scmp.eq.s32.totalorder %s204, 0
      %s207 = sadd.s32 %s206, 1
      %s208 = scalar_select %p205, %s206, %s207
      %p211 = pneg %p205
      %p212 = scmp.eq.s32.totalorder %s28, 1
      %p213 = por %p211, %p212
      %p214 = scmp.ne.s32.totalorder %s206, %s209
      %p215 = scmp.eq.s32.totalorder %s28, 0
      %p216 = por %p214, %p215
      %p217 = scmp.ne.s32.totalorder %s206, %s209
      %p218 = scmp.eq.s32.totalorder %s33, 1
      %p219 = por %p217, %p218
      %p220 = scmp.ne.s32.totalorder %s209, %s210
      %p221 = scmp.eq.s32.totalorder %s33, 0
      %p222 = por %p220, %p221
      %p223 = scmp.ne.s32.totalorder %s209, %s210
      %p224 = scmp.eq.s32.totalorder %s34, 1
      %p225 = por %p223, %p224
      %p227 = scmp.ne.s32.totalorder %s210, %s226
      %p228 = scmp.eq.s32.totalorder %s34, 0
      %p229 = por %p227, %p228
      %p230 = scmp.le.s32.totalorder 1, %s28
      %p231 = scmp.lt.s32.totalorder %s28, 3
      %p232 = pnand %p230, %p231
      %p233 = pneg %p232
      // Predicated region
      $region9: #{tpu_custom_call.1} parent=5 // pred_check
        _
      $region10: #{tpu_custom_call.1} parent=5 // pred_check_branch
        %235 = sbr.rel (%p232) target = $region12
      $region11: #{tpu_custom_call.1} parent=5 // pred_region
        %s236 = ssub.s32 %s28, 1
        // Predicated region
        $region13: #{tpu_custom_call.1} parent=11 // pred_check
          %p237 = pneg %p173
        $region14: #{tpu_custom_call.1} parent=11 // pred_check_branch
          %239 = sbr.rel (%p237) target = $region16
        $region15: #{tpu_custom_call.1} parent=11 // pred_region
          %s241 = ssub.s32 64, 64
          %242 = vsyncadd [#allocation7], %s241
          %s244 = sshll.u32 %s5, 4
          %s245 = int_to_ptr.vmem [resolvable:$true] %s244
          %247 = dma.vmem_to_smem %s245, 64, [#allocation11], [#allocation7]
        $region16: #{tpu_custom_call.1} parent=11 // pred_fallthru
          _
        // Predicated region
        $region17: #{tpu_custom_call.1} parent=11 // pred_check
          %p248 = pneg %p194
        $region18: #{tpu_custom_call.1} parent=11 // pred_check_branch
          %250 = sbr.rel (%p248) target = $region20
        $region19: #{tpu_custom_call.1} parent=11 // pred_region
          %s252 = ssub.s32 16, 16
          %253 = vsyncadd [#allocation13], %s252
          %s255 = sshll.u32 %s6, 4
          %s256 = int_to_ptr.vmem [resolvable:$true] %s255
          %258 = dma.vmem_to_smem %s256, 16, [#allocation12], [#allocation13]
        $region20: #{tpu_custom_call.1} parent=11 // pred_fallthru
          _
      $region12: #{tpu_custom_call.1} parent=5 // pred_fallthru
        _
      %p259 = scmp.lt.s32.totalorder %s28, 2
      // Predicated region
      $region21: #{tpu_custom_call.1} parent=5 // pred_check
        %p260 = pneg %p259
      $region22: #{tpu_custom_call.1} parent=5 // pred_check_branch
        %262 = sbr.rel (%p260) target = $region24
      $region23: #{tpu_custom_call.1} parent=5 // pred_region
        // Predicated region
        $region25: #{tpu_custom_call.1} parent=23 // pred_check
          %p263 = pneg %p62
        $region26: #{tpu_custom_call.1} parent=23 // pred_check_branch
          %265 = sbr.rel (%p263) target = $region28
        $region27: #{tpu_custom_call.1} parent=23 // pred_region
          %s266 = sand.u32 %s52, 1
          %s267 = scalar_lea.sflag [#allocation5], %s266
          %s268 = sand.u32 %s52, 1
          %s269 = smul.addr %s268, 8
          %s270 = scalar_lea.vmem [#allocation4], %s269
          %s271 = smul.u32 2, %s36
          %s273 = ssub.s32 128, 128
          %274 = vsyncadd %s267, %s273
          %s275 = smul.addr %s35, 2
          %s276 = sadd.s32 %s271, %s275
          %s277 = smul.addr %s276, 64
          %s278 = scalar_lea.hbm %s1, %s277
          %s280 = sshll.u32 %s270, 4
          %s281 = int_to_ptr.vmem [resolvable:$true] %s280
          %283 = dma.hbm_to_vmem [thread:$0]  %s278, 128, %s281, %s267
        $region28: #{tpu_custom_call.1} parent=23 // pred_fallthru
          _
        // Predicated region
        $region29: #{tpu_custom_call.1} parent=23 // pred_check
          %p284 = pneg %p90
        $region30: #{tpu_custom_call.1} parent=23 // pred_check_branch
          %286 = sbr.rel (%p284) target = $region32
        $region31: #{tpu_custom_call.1} parent=23 // pred_region
          %s287 = smul.u32 2, %s36
          %p288 = scmp.lt.s32.totalorder %s35, 1
          %s289 = scalar_select %p288, %s35, 1
          %p290 = scmp.lt.s32.totalorder %s287, 1
          %s291 = scalar_select %p290, %s287, 1
          %s292 = smul.addr %s289, 2
          %s293 = sadd.s32 %s291, %s292
          %s294 = scalar_lea.vmem %s2, %s293
          %s295 = smul.u32 2, %s36
        $region32: #{tpu_custom_call.1} parent=23 // pred_fallthru
          _
        // Predicated region
        $region33: #{tpu_custom_call.1} parent=23 // pred_check
          %p296 = pneg %p118
        $region34: #{tpu_custom_call.1} parent=23 // pred_check_branch
          %298 = sbr.rel (%p296) target = $region36
        $region35: #{tpu_custom_call.1} parent=23 // pred_region
          %s299 = sand.u32 %s28, 1
          %s300 = scalar_lea.sflag [#allocation9], %s299
          %s301 = sand.u32 %s108, 1
          %s302 = smul.addr %s301, 8
          %s303 = scalar_lea.vmem [#allocation8], %s302
          %s304 = smul.u32 2, %s36
          %s306 = ssub.s32 128, 128
          %307 = vsyncadd %s300, %s306
          %s308 = smul.addr %s35, 2
          %s309 = sadd.s32 %s304, %s308
          %s310 = smul.addr %s309, 64
          %s311 = scalar_lea.hbm %s3, %s310
          %s313 = sshll.u32 %s303, 4
          %s314 = int_to_ptr.vmem [resolvable:$true] %s313
          %316 = dma.hbm_to_vmem [thread:$0]  %s311, 128, %s314, %s300
        $region36: #{tpu_custom_call.1} parent=23 // pred_fallthru
          _
        // Predicated region
        $region37: #{tpu_custom_call.1} parent=23 // pred_check
          %p317 = pneg %p146
        $region38: #{tpu_custom_call.1} parent=23 // pred_check_branch
          %319 = sbr.rel (%p317) target = $region40
        $region39: #{tpu_custom_call.1} parent=23 // pred_region
          %s320 = sand.u32 %s28, 1
          %s321 = scalar_lea.sflag [#allocation9], %s320
          %s322 = sand.u32 %s136, 1
          %s323 = smul.addr %s322, 8
          %s324 = scalar_lea.vmem [#allocation10], %s323
          %s325 = smul.u32 2, %s36
          %s327 = ssub.s32 128, 128
          %328 = vsyncadd %s321, %s327
          %s329 = smul.addr %s35, 2
          %s330 = sadd.s32 %s325, %s329
          %s331 = smul.addr %s330, 64
          %s332 = scalar_lea.hbm %s4, %s331
          %s334 = sshll.u32 %s324, 4
          %s335 = int_to_ptr.vmem [resolvable:$true] %s334
          %337 = dma.hbm_to_vmem [thread:$0]  %s332, 128, %s335, %s321
        $region40: #{tpu_custom_call.1} parent=23 // pred_fallthru
          _
      $region24: #{tpu_custom_call.1} parent=5 // pred_fallthru
        _
      %p338 = scmp.le.s32.totalorder 1, %s28
      %p339 = scmp.lt.s32.totalorder %s28, 3
      %p340 = pnand %p338, %p339
      %p341 = pneg %p340
      // Predicated region
      $region41: #{tpu_custom_call.1} parent=5 // pred_check
        _
      $region42: #{tpu_custom_call.1} parent=5 // pred_check_branch
        %343 = sbr.rel (%p340) target = $region44
      $region43: #{tpu_custom_call.1} parent=5 // pred_region
        %s344 = ssub.s32 %s28, 1
        %s345 = sand.u32 %s55, 1
        %s346 = scalar_lea.sflag [#allocation5], %s345
        %s347 = sand.u32 %s55, 1
        %s348 = smul.addr %s347, 8
        %s349 = scalar_lea.vmem [#allocation4], %s348
        // Predicated region
        $region45: #{tpu_custom_call.1} parent=43 // pred_check
          %p350 = pneg %p68
        $region46: #{tpu_custom_call.1} parent=43 // pred_check_branch
          %352 = sbr.rel (%p350) target = $region48
        $region47: #{tpu_custom_call.1} parent=43 // pred_region
          %353 = dma.done %s346, 128
        $region48: #{tpu_custom_call.1} parent=43 // pred_fallthru
          _
        %s354 = sand.u32 %s33, 1
        %s355 = scalar_lea.sflag [#allocation9], %s354
        %s356 = sand.u32 %s111, 1
        %s357 = smul.addr %s356, 8
        %s358 = scalar_lea.vmem [#allocation8], %s357
        // Predicated region
        $region49: #{tpu_custom_call.1} parent=43 // pred_check
          %p359 = pneg %p124
        $region50: #{tpu_custom_call.1} parent=43 // pred_check_branch
          %361 = sbr.rel (%p359) target = $region52
        $region51: #{tpu_custom_call.1} parent=43 // pred_region
          %362 = dma.done %s355, 128
        $region52: #{tpu_custom_call.1} parent=43 // pred_fallthru
          _
        %s363 = sand.u32 %s33, 1
        %s364 = scalar_lea.sflag [#allocation9], %s363
        %s365 = sand.u32 %s139, 1
        %s366 = smul.addr %s365, 8
        %s367 = scalar_lea.vmem [#allocation10], %s366
        // Predicated region
        $region53: #{tpu_custom_call.1} parent=43 // pred_check
          %p368 = pneg %p152
        $region54: #{tpu_custom_call.1} parent=43 // pred_check_branch
          %370 = sbr.rel (%p368) target = $region56
        $region55: #{tpu_custom_call.1} parent=43 // pred_region
          %371 = dma.done %s364, 128
        $region56: #{tpu_custom_call.1} parent=43 // pred_fallthru
          _
        // Predicated region
        $region57: #{tpu_custom_call.1} parent=43 // pred_check
          %p372 = pneg %p173
        $region58: #{tpu_custom_call.1} parent=43 // pred_check_branch
          %374 = sbr.rel (%p372) target = $region60
        $region59: #{tpu_custom_call.1} parent=43 // pred_region
          %375 = dma.done [#allocation7], 64
        $region60: #{tpu_custom_call.1} parent=43 // pred_fallthru
          _
        // Predicated region
        $region61: #{tpu_custom_call.1} parent=43 // pred_check
          %p376 = pneg %p194
        $region62: #{tpu_custom_call.1} parent=43 // pred_check_branch
          %378 = sbr.rel (%p376) target = $region64
        $region63: #{tpu_custom_call.1} parent=43 // pred_region
          %379 = dma.done [#allocation13], 16
        $region64: #{tpu_custom_call.1} parent=43 // pred_fallthru
          _
        %380 = sfence
        %s381 = sand.u32 %s55, 1
        %s382 = scalar_lea.sflag [#allocation5], %s381
        %s383 = sand.u32 %s55, 1
        %s384 = smul.addr %s383, 8
        %s385 = scalar_lea.vmem [#allocation4], %s384
        %p386 = pneg %p68
        %p387 = pneg %p65
        %s388 = smul.u32 2, %s38
        %p389 = scmp.lt.s32.totalorder %s37, 1
        %s390 = scalar_select %p389, %s37, 1
        %p391 = scmp.lt.s32.totalorder %s388, 1
        %s392 = scalar_select %p391, %s388, 1
        %s393 = smul.addr %s390, 2
        %s394 = sadd.s32 %s392, %s393
        %s395 = scalar_lea.vmem %s2, %s394
        %p396 = pneg %p96
        %p397 = pneg %p93
        %s398 = sand.u32 %s33, 1
        %s399 = scalar_lea.sflag [#allocation9], %s398
        %s400 = sand.u32 %s111, 1
        %s401 = smul.addr %s400, 8
        %s402 = scalar_lea.vmem [#allocation8], %s401
        %p403 = pneg %p124
        %p404 = pneg %p121
        %s405 = sand.u32 %s33, 1
        %s406 = scalar_lea.sflag [#allocation9], %s405
        %s407 = sand.u32 %s139, 1
        %s408 = smul.addr %s407, 8
        %s409 = scalar_lea.vmem [#allocation10], %s408
        %p410 = pneg %p152
        %p411 = pneg %p149
        %p412 = pneg %p173
        %p413 = pneg %p170
        %p414 = pneg %p194
        %p415 = pneg %p191
        %p416 = pneg %p222
        %p417 = pneg %p219
        %s418 = sand.u32 %s209, 1
        %s419 = scalar_lea.sflag [#allocation6], %s418
        %s420 = sand.u32 %s209, 1
        %s421 = smul.addr %s420, 8
        %s422 = scalar_lea.vmem [#allocation14], %s421
        %s423 = smul.u32 2, %s38
        %s424 = smul.u32 2, %s38
        %p425 = scmp.lt.s32.totalorder %s37, 1
        %s426 = scalar_select %p425, %s37, 1
        %p427 = scmp.lt.s32.totalorder %s424, 1
        %s428 = scalar_select %p427, %s424, 1
        %s429 = smul.addr %s426, 2
        %s430 = sadd.s32 %s428, %s429
        %s431 = scalar_lea.vmem %s2, %s430
        %s432 = smul.u32 2, %s38
        %s433 = smul.u32 2, %s38
        %s434 = smul.u32 2, %s38
        %s435 = smul.u32 2, %s38
        %s436 = sld [smem:[#allocation3 + %s37]]
        %v437 = vld [vmem:[%s349] sm:$0xff]
        %v438 = vld [vmem:[%s431] sm:$0x3]
        %v439 = vld [vmem:[%s358] sm:$0xff]
        %v440 = vld [vmem:[%s367] sm:$0xff]
        %v441 = vsub.f32 1.0, %v438
        %v443 = vlaneseq
        %v444 = vshrl.u32 %v443, 7
        %v445 = vsub.s32 0, %v444
        %v446 = vrot.slane %v438, %v445
        %v447 = vlaneseq
        %v448 = vshrl.u32 %v447, 7
        %v449 = vsub.s32 1, %v448
        %v450 = vrot.slane %v438, %v449
        %v453 = vcombine.low %v446, %v450
        %v455 = vmul.f32 %v437, %v453
        %v456 = vstv %s436
        %v457 = vmul.f32 %v440, %v456
        %v458 = vadd.f32 %v439, %v457
        %v460 = vlaneseq
        %v461 = vshrl.u32 %v460, 7
        %v462 = vsub.s32 0, %v461
        %v463 = vrot.slane %v441, %v462
        %v464 = vlaneseq
        %v465 = vshrl.u32 %v464, 7
        %v466 = vsub.s32 1, %v465
        %v467 = vrot.slane %v441, %v466
        %v468 = vcombine.low %v463, %v467
        %v470 = vmul.f32 %v458, %v468
        %v471 = vadd.f32 %v455, %v470
        %s472 = sld [smem:[#allocation11]]
        %v473 = vstv %s472
        %v474 = vmul.f32 %v471, %v473
        %s475 = sld [smem:[#allocation11 + $0x1]]
        %v476 = vstv %s475
        %v477 = vmul.f32 %v471, %v476
        %v479 = vrot.slane %v477, 5
        %v480 = vrot.slane %v479, 4
        %v482 = vadd.f32 %v474, %v480
        %s483 = sld [smem:[#allocation11 + $0x2]]
        %v484 = vstv %s483
        %v485 = vmul.f32 %v471, %v484
        %v487 = vrot.slane %v485, 6
        %v488 = vrot.slane %v487, 4
        %v490 = vadd.f32 %v482, %v488
        %s491 = sld [smem:[#allocation11 + $0x3]]
        %v492 = vstv %s491
        %v493 = vmul.f32 %v471, %v492
        %v495 = vrot.slane %v493, 7
        %v496 = vrot.slane %v495, 4
        %v498 = vadd.f32 %v490, %v496
        %s499 = sld [smem:[#allocation12]]
        %v500 = vstv %s499
        %v501 = vadd.f32 %v498, %v500
        %s502 = sld [smem:[#allocation11 + $0x80]]
        %v503 = vstv %s502
        %v504 = vmul.f32 %v471, %v503
        %s505 = sld [smem:[#allocation11 + $0x81]]
        %v506 = vstv %s505
        %v507 = vmul.f32 %v471, %v506
        %v509 = vrot.slane %v507, 5
        %v510 = vrot.slane %v509, 4
        %v512 = vadd.f32 %v504, %v510
        %s513 = sld [smem:[#allocation11 + $0x82]]
        %v514 = vstv %s513
        %v515 = vmul.f32 %v471, %v514
        %v517 = vrot.slane %v515, 6
        %v518 = vrot.slane %v517, 4
        %v520 = vadd.f32 %v512, %v518
        %s521 = sld [smem:[#allocation11 + $0x83]]
        %v522 = vstv %s521
        %v523 = vmul.f32 %v471, %v522
        %v525 = vrot.slane %v523, 7
        %v526 = vrot.slane %v525, 4
        %v528 = vadd.f32 %v520, %v526
        %s529 = sld [smem:[#allocation12 + $0x1]]
        %v530 = vstv %s529
        %v531 = vadd.f32 %v528, %v530
        %s532 = sld [smem:[#allocation11 + $0x100]]
        %v533 = vstv %s532
        %v534 = vmul.f32 %v471, %v533
        %s535 = sld [smem:[#allocation11 + $0x101]]
        %v536 = vstv %s535
        %v537 = vmul.f32 %v471, %v536
        %v539 = vrot.slane %v537, 5
        %v540 = vrot.slane %v539, 4
        %v542 = vadd.f32 %v534, %v540
        %s543 = sld [smem:[#allocation11 + $0x102]]
        %v544 = vstv %s543
        %v545 = vmul.f32 %v471, %v544
        %v547 = vrot.slane %v545, 6
        %v548 = vrot.slane %v547, 4
        %v550 = vadd.f32 %v542, %v548
        %s551 = sld [smem:[#allocation11 + $0x103]]
        %v552 = vstv %s551
        %v553 = vmul.f32 %v471, %v552
        %v555 = vrot.slane %v553, 7
        %v556 = vrot.slane %v555, 4
        %v558 = vadd.f32 %v550, %v556
        %s559 = sld [smem:[#allocation12 + $0x2]]
        %v560 = vstv %s559
        %v561 = vadd.f32 %v558, %v560
        %s562 = sld [smem:[#allocation11 + $0x180]]
        %v563 = vstv %s562
        %v564 = vmul.f32 %v471, %v563
        %s565 = sld [smem:[#allocation11 + $0x181]]
        %v566 = vstv %s565
        %v567 = vmul.f32 %v471, %v566
        %v569 = vrot.slane %v567, 5
        %v570 = vrot.slane %v569, 4
        %v572 = vadd.f32 %v564, %v570
        %s573 = sld [smem:[#allocation11 + $0x182]]
        %v574 = vstv %s573
        %v575 = vmul.f32 %v471, %v574
        %v577 = vrot.slane %v575, 6
        %v578 = vrot.slane %v577, 4
        %v580 = vadd.f32 %v572, %v578
        %s581 = sld [smem:[#allocation11 + $0x183]]
        %v582 = vstv %s581
        %v583 = vmul.f32 %v471, %v582
        %v585 = vrot.slane %v583, 7
        %v586 = vrot.slane %v585, 4
        %v588 = vadd.f32 %v580, %v586
        %s589 = sld [smem:[#allocation12 + $0x3]]
        %v590 = vstv %s589
        %v591 = vadd.f32 %v588, %v590
        %v593 = vlaneseq
        %v594 = vshrl.u32 %v593, 7
        %v595 = vsub.s32 0, %v594
        %v596 = vrot.slane %v501, %v595
        %v597 = vlaneseq
        %v598 = vshrl.u32 %v597, 7
        %v599 = vsub.s32 4, %v598
        %v600 = vrot.slane %v501, %v599
        %v604 = vlaneseq
        %v605 = vshrl.u32 %v604, 7
        %v606 = vsub.s32 0, %v605
        %v607 = vrot.slane %v531, %v606
        %v608 = vlaneseq
        %v609 = vshrl.u32 %v608, 7
        %v610 = vsub.s32 4, %v609
        %v611 = vrot.slane %v531, %v610
        %v615 = vlaneseq
        %v616 = vshrl.u32 %v615, 7
        %v617 = vsub.s32 0, %v616
        %v618 = vrot.slane %v561, %v617
        %v619 = vlaneseq
        %v620 = vshrl.u32 %v619, 7
        %v621 = vsub.s32 4, %v620
        %v622 = vrot.slane %v561, %v621
        %v626 = vlaneseq
        %v627 = vshrl.u32 %v626, 7
        %v628 = vsub.s32 0, %v627
        %v629 = vrot.slane %v591, %v628
        %v630 = vlaneseq
        %v631 = vshrl.u32 %v630, 7
        %v632 = vsub.s32 4, %v631
        %v633 = vrot.slane %v591, %v632
        %vm636 = vcmask 1040384
        %v637 = vsel %vm636, %v596, %v607
        %v638 = vsel %vm636, %v600, %v611
        %vm639 = vcmask 1041408
        %v640 = vsel %vm639, %v637, %v618
        %v641 = vsel %vm639, %v638, %v622
        %vm642 = vcmask 1042432
        %v643 = vsel %vm642, %v640, %v629
        %v644 = vsel %vm642, %v641, %v633
        %s645 = smul.f32 %s436, %s436
        %s646 = sadd.f32 %s645, 1.0
        %v647 = vstv %s646
        %v648 = vrcp.pop %v647
        %s649 = vtos %v648
        %v650 = vstv %s649
        %v651 = vmul.f32 %v643, %v650
        %v652 = vmul.f32 %v644, %v650
        %v653 = vmul.f32 %v651, %v446
        %v654 = vmul.f32 %v652, %v450
        %v655 = vmul.f32 %v439, %v468
        %v657 = vcombine.high %v655, %v655
        %v659 = vadd.f32 %v653, %v655
        %v660 = vadd.f32 %v654, %v657
        %v663 = vcombine.low %v659, %v660
        %665 = vst [vmem:[%s422] sm:$0xff] %v663
        %s666 = sand.u32 %s209, 1
        %s667 = scalar_lea.sflag [#allocation6], %s666
        %s668 = sand.u32 %s209, 1
        %s669 = smul.addr %s668, 8
        %s670 = scalar_lea.vmem [#allocation14], %s669
        // Predicated region
        $region65: #{tpu_custom_call.1} parent=43 // pred_check
          %p671 = pneg %p219
        $region66: #{tpu_custom_call.1} parent=43 // pred_check_branch
          %673 = sbr.rel (%p671) target = $region68
        $region67: #{tpu_custom_call.1} parent=43 // pred_region
          %s674 = smul.u32 2, %s38
          %s676 = ssub.s32 128, 128
          %677 = vsyncadd %s667, %s676
          %s678 = smul.addr %s37, 2
          %s679 = sadd.s32 %s674, %s678
          %s680 = smul.addr %s679, 64
          %s681 = scalar_lea.hbm %s7, %s680
          %s683 = sshll.u32 %s670, 4
          %s684 = int_to_ptr.vmem [resolvable:$true] %s683
          %686 = dma.vmem_to_hbm [thread:$0]  %s684, 128, %s681, %s667
        $region68: #{tpu_custom_call.1} parent=43 // pred_fallthru
          _
      $region44: #{tpu_custom_call.1} parent=5 // pred_fallthru
        _
      %p687 = scmp.le.s32.totalorder 2, %s28
      // Predicated region
      $region69: #{tpu_custom_call.1} parent=5 // pred_check
        %p688 = pneg %p687
      $region70: #{tpu_custom_call.1} parent=5 // pred_check_branch
        %690 = sbr.rel (%p688) target = $region72
      $region71: #{tpu_custom_call.1} parent=5 // pred_region
        %s691 = ssub.s32 %s28, 2
        // Predicated region
        $region73: #{tpu_custom_call.1} parent=71 // pred_check
          %p692 = pneg %p225
        $region74: #{tpu_custom_call.1} parent=71 // pred_check_branch
          %694 = sbr.rel (%p692) target = $region76
        $region75: #{tpu_custom_call.1} parent=71 // pred_region
          %s695 = sand.u32 %s210, 1
          %s696 = scalar_lea.sflag [#allocation6], %s695
          %s697 = sand.u32 %s210, 1
          %s698 = smul.addr %s697, 8
          %s699 = scalar_lea.vmem [#allocation14], %s698
          %700 = dma.done %s696, 128
        $region76: #{tpu_custom_call.1} parent=71 // pred_fallthru
          _
      $region72: #{tpu_custom_call.1} parent=5 // pred_fallthru
        _
    $region6: #{tpu_custom_call.1} parent=1 // loop_footer
      %s32 = sadd.s32 1, %s28
    $region7: #{tpu_custom_call.1} parent=1 // loop_footer_branch
      %27 = sbr.rel target = $region3
    $region8: #{tpu_custom_call.1} parent=1 // loop_exit
      _
    %701 = vsyncpa [#allocation5], 1
    %s702 = scalar_lea.sflag [#allocation5], 1
    %703 = vsyncpa %s702, 1
    %704 = vsyncpa [#allocation9], 1
    %s705 = scalar_lea.sflag [#allocation9], 1
    %706 = vsyncpa %s705, 1
    %707 = vsyncpa [#allocation6], 1
    %s708 = scalar_lea.sflag [#allocation6], 1
    %709 = vsyncpa %s708, 1
    %710 = vsyncpa [#allocation7], 1
    %s711 = scalar_lea.sflag [#allocation7], 1
    %712 = vsyncpa %s711, 1
    %713 = vsyncpa [#allocation13], 1

</llo_original>
